<compile_context>
chip_gen: v6e
topology: v6e:2x2x1
jax: 0.10.0
libtpu: 0.0.40
codegen_flags: <defaults>
</compile_context>

<pallas_src>
import jax
import jax.numpy as jnp
from jax import lax
from jax.experimental import pallas as pl
from jax.experimental.pallas import tpu as pltpu


def _round_up(v, m):
    return (v + m - 1) // m * m


def _cdiv(a, b):
    return (a + b - 1) // b


def _reward_kernel_single(x_ref, w_ref, o_ref):
    # x_ref: (tm, K) activations tile; w_ref: (N_pad, K) resident weight.
    # Contract the last dims of both => x @ W^T, f32 accumulation on the MXU.
    o_ref[...] = lax.dot_general(
        x_ref[...],
        w_ref[...],
        dimension_numbers=(((1,), (1,)), ((), ())),
        preferred_element_type=jnp.float32,
    ).astype(o_ref.dtype)


def _make_ktiled_kernel(valid_last_cols):
    # valid_last_cols: number of valid K columns in the final (ragged) K tile,
    # or None when K % tk == 0 (no masking required).
    def kernel(x_ref, w_ref, o_ref, acc_ref):
        k = pl.program_id(1)
        nk = pl.num_programs(1)

        @pl.when(k == 0)
        def _():
            acc_ref[...] = jnp.zeros_like(acc_ref)

        x = x_ref[...]
        w = w_ref[...]
        if valid_last_cols is not None:
            # Zero out-of-range columns of BOTH operands on the ragged final K
            # tile so uninitialized (possibly NaN) lanes never reach the sum.
            limit = jnp.where(k == nk - 1, valid_last_cols, x.shape[-1])
            col_x = lax.broadcasted_iota(jnp.int32, x.shape, 1)
            col_w = lax.broadcasted_iota(jnp.int32, w.shape, 1)
            x = jnp.where(col_x < limit, x, 0)
            w = jnp.where(col_w < limit, w, 0)

        acc_ref[...] += lax.dot_general(
            x,
            w,
            dimension_numbers=(((1,), (1,)), ((), ())),
            preferred_element_type=jnp.float32,
        )

        @pl.when(k == nk - 1)
        def _():
            o_ref[...] = acc_ref[...].astype(o_ref.dtype)

    return kernel


def reward_func_forward(x, w):
    """Pallas implementation of RewardFunc.forward: x @ w.T (no bias).

    x: [B, input_dim]
    w: [output_dim, input_dim]  (PyTorch nn.Linear weight convention)
    returns: [B, output_dim]
    """
    B, K = x.shape
    N, Kw = w.shape
    assert K == Kw, "input_dim mismatch between x and w"

    x_isz = jnp.dtype(x.dtype).itemsize
    o_isz = x_isz  # output is produced in x.dtype

    # Lane-dense output: pad output_dim to a multiple of 128 (cheap: W only).
    N_pad = _round_up(max(N, 128), 128)
    w_p = w if N_pad == N else jnp.pad(w, ((0, N_pad - N), (0, 0)))

    # --- per-generation VMEM budget --------------------------------------
    try:
        vmem_cap = int(pltpu.get_tpu_info().vmem_capacity_bytes)
    except Exception:
        vmem_cap = 64 << 20  # conservative (v7x) fallback
    vmem_budget = min(vmem_cap - (8 << 20), 100 << 20)
    tm_max = 512 if vmem_cap <= (64 << 20) else 1024

    # --- batch tiling (balanced, megacore-friendly) -----------------------
    if B < 8:
        tm = B  # block == full dim is allowed for tiny batches
    else:
        if B <= tm_max:
            # >= 2 tiles for mid/large B so the "parallel" axis can shard
            # across v7x's two TensorCores; a single tile for small B.
            n_m = 2 if B >= 256 else 1
        else:
            n_m = _cdiv(B, tm_max)
            if B >= 256 and n_m % 2:
                n_m += 1  # balanced, even tile count
        tm = min(_round_up(_cdiv(B, n_m), 8), _round_up(B, 8))

    def vmem_needed(tm_, tk_, k_tiled):
        w_bufs = 2 if k_tiled else 1        # W is re-DMA'd only when K is tiled
        need = 2 * tm_ * tk_ * x_isz        # x tiles, double-buffered
        need += w_bufs * N_pad * tk_ * x_isz
        need += 2 * tm_ * N_pad * o_isz     # out tiles, double-buffered
        if k_tiled:
            need += tm_ * N_pad * 4         # f32 accumulator scratch
        return need

    # Prefer keeping tm large and tiling K when the resident weight + x tiles
    # exceed the budget; only shrink tm as a last resort.
    tk = K
    k_tiled = False
    if vmem_needed(tm, tk, False) > vmem_budget and K > 128:
        k_tiled = True
        tk = (K // 128) * 128
        while tk > 128 and vmem_needed(tm, tk, True) > vmem_budget:
            tk = max(128, _round_up(tk // 2, 128))
    while tm > 8 and vmem_needed(tm, tk, k_tiled) > vmem_budget:
        tm = max(8, _round_up(tm // 2, 8))
    # TODO(synk): also tile N if N_pad * tk alone ever exceeds the VMEM budget
    # (never the case for reward heads, where output_dim is tiny).

    n_m = _cdiv(B, tm)
    need = vmem_needed(tm, tk, k_tiled)
    vmem_limit = int(min(max(need + (8 << 20), 32 << 20), vmem_cap - (4 << 20)))

    cost = pl.CostEstimate(
        flops=2 * B * K * N_pad,
        bytes_accessed=(B * K + N_pad * K) * x_isz + B * N_pad * o_isz,
        transcendentals=0,
    )

    if not k_tiled:
        out = pl.pallas_call(
            _reward_kernel_single,
            out_shape=jax.ShapeDtypeStruct((B, N_pad), x.dtype),
            grid=(n_m,),
            in_specs=[
                # x: tiled over batch, no wrapper-side padding; Pallas clips
                # the ragged final tile.
                pl.BlockSpec((tm, K), lambda i: (i, 0)),
                # W: constant block index -> never re-DMA'd; single-buffered.
                pl.BlockSpec((N_pad, K), lambda i: (0, 0),
                             pipeline_mode=pl.Buffered(1)),
            ],
            out_specs=pl.BlockSpec((tm, N_pad), lambda i: (i, 0)),
            compiler_params=pltpu.CompilerParams(
                dimension_semantics=("parallel",),
                vmem_limit_bytes=vmem_limit,
            ),
            cost_estimate=cost,
        )(x, w_p)
    else:
        n_k = _cdiv(K, tk)
        valid_last = K - (n_k - 1) * tk
        kernel = _make_ktiled_kernel(None if valid_last == tk else valid_last)
        out = pl.pallas_call(
            kernel,
            out_shape=jax.ShapeDtypeStruct((B, N_pad), x.dtype),
            grid=(n_m, n_k),
            in_specs=[
                pl.BlockSpec((tm, tk), lambda i, k: (i, k)),
                pl.BlockSpec((N_pad, tk), lambda i, k: (0, k)),
            ],
            out_specs=pl.BlockSpec((tm, N_pad), lambda i, k: (i, 0)),
            scratch_shapes=[pltpu.VMEM((tm, N_pad), jnp.float32)],
            compiler_params=pltpu.CompilerParams(
                dimension_semantics=("parallel", "arbitrary"),
                vmem_limit_bytes=vmem_limit,
            ),
            cost_estimate=cost,
        )(x, w_p)

    # Strip output-dim padding only when actually padded (skip the no-op slice).
    return out if N_pad == N else out[:, :N]


if __name__ == "__main__":
    key = jax.random.PRNGKey(0)
    k_x, k_w = jax.random.split(key)

    batch = 8
    input_dim = 32
    output_dim = 16

    # RewardFunc params: nn.Linear(input_dim, output_dim, bias=False) with
    # init_weights_with_norm_one -> W ~ N(0, 0.1), bias absent.
    x = jax.random.normal(k_x, (batch, input_dim), dtype=jnp.float32)
    w = 0.1 * jax.random.normal(k_w, (output_dim, input_dim), dtype=jnp.float32)

    out = reward_func_forward(x, w)
    jax.block_until_ready(out)

    # Sanity check against plain JAX reference.
    ref = x @ w.T
    assert out.shape == (batch, output_dim)
    assert jnp.allclose(out, ref, atol=1e-5, rtol=1e-5)

    print("KERNEL_OK")
</pallas_src>

<mosaic_0001>
module attributes {stable_mosaic.version = 11 : i64} {
  func.func @_reward_kernel_single(%arg0: i32, %arg1: memref<8x32xf32, #tpu.memory_space<vmem>>, %arg2: memref<128x32xf32, #tpu.memory_space<vmem>>, %arg3: memref<8x128xf32, #tpu.memory_space<vmem>>) attributes {dimension_semantics = [#tpu.dimension_semantics<parallel>], iteration_bounds = array<i64: 1>, scalar_prefetch = 0 : i64, scratch_operands = 0 : i64, tpu.core_type = #tpu.core_type<tc>, window_params = [{transform_indices = @transform_0, window_bounds = array<i64: 8, 32>}, {pipeline_mode = #tpu.pipeline_mode<synchronous>, transform_indices = @transform_1, window_bounds = array<i64: 128, 32>}, {transform_indices = @transform_2, window_bounds = array<i64: 8, 128>}]} {
    %c0 = arith.constant 0 : index
    %c0_0 = arith.constant 0 : index
    %0 = vector.load %arg1[%c0, %c0_0] : memref<8x32xf32, #tpu.memory_space<vmem>>, vector<8x32xf32>
    %c0_1 = arith.constant 0 : index
    %c0_2 = arith.constant 0 : index
    %1 = vector.load %arg2[%c0_1, %c0_2] : memref<128x32xf32, #tpu.memory_space<vmem>>, vector<128x32xf32>
    %cst = arith.constant dense<0.000000e+00> : vector<8x128xf32>
    %2 = tpu.matmul %0, %1, %cst {dimension_numbers = #tpu.dot_dimension_numbers<[1], [1], [0], [0], [0, 0, 1, 0], [], []>} : vector<8x32xf32>, vector<128x32xf32>, vector<8x128xf32> -> vector<8x128xf32>
    %c0_3 = arith.constant 0 : index
    %c0_4 = arith.constant 0 : index
    %3 = vector.load %arg3[%c0_3, %c0_4] : memref<8x128xf32, #tpu.memory_space<vmem>>, vector<8x128xf32>
    tpu.vector_store %arg3[%c0_3, %c0_4], %2 {strides = array<i32>} : memref<8x128xf32, #tpu.memory_space<vmem>>, vector<8x128xf32>,
    return
  }
  func.func @transform_0(%arg0: i32) -> (i32, i32) {
    %c0_i32 = arith.constant 0 : i32
    %c0_i32_0 = arith.constant 0 : i32
    return %arg0, %c0_i32 : i32, i32
  }
  func.func @transform_1(%arg0: i32) -> (i32, i32) {
    %c0_i32 = arith.constant 0 : i32
    %c0_i32_0 = arith.constant 0 : i32
    %c0_i32_1 = arith.constant 0 : i32
    return %c0_i32, %c0_i32_0 : i32, i32
  }
  func.func @transform_2(%arg0: i32) -> (i32, i32) {
    %c0_i32 = arith.constant 0 : i32
    %c0_i32_0 = arith.constant 0 : i32
    return %arg0, %c0_i32 : i32, i32
  }
}

</mosaic_0001>

<llo_original>
// kernel: tpu_custom_call.1
$region0: #{tpu_custom_call.1}
  #allocation0 [shape = 'u32[]', space=smem, size = 0x4, offset = 0x4, fixed_abs, tag = 'smem constant byte address 0x4 - core index']
  #allocation1 [shape = 'u32[144,128]{1,0:T(1,128)}', space=vmem, size = 0x12000, scoped, tag = 'internal scratch']
  %s0 = inlined_call_operand.vmem [shape: f32[8,32], index: 0, kind: input, shape index: {}]
  %s1 = inlined_call_operand.vmem [shape: f32[128,32], index: 1, kind: input, shape index: {}]
  %s2 = inlined_call_operand.hbm [shape: f32[8,128], index: 2, kind: output, shape index: {}]
  %s3 = sld [smem:[#allocation0]]
  $region18: #{tpu_custom_call.1} parent=0
    _
  %s5 = ssub.s32 1, %s3
  %s6 = scalar_select 0, %s5, %s3
  $region1: #{tpu_custom_call.1} parent=0
    #allocation2 [shape = 'u8[4096]{0}', space=vmem, size = 0x1000, scoped, tag = 'output window, operand 0, single buffered']
    #allocation3 [shape = 's32[1]{0}', space=sflag, size = 0x4, scoped, tag = 'scoped memory for tpu_custom_call.1']
    %7 = vsyncpa [#allocation3], 0
    // Predicated region
    $region2: #{tpu_custom_call.1} parent=1 // pred_check
      _
    $region3: #{tpu_custom_call.1} parent=1 // pred_check_branch
      %9 = sbr.rel (0) target = $region5
    $region4: #{tpu_custom_call.1} parent=1 // pred_region
      _
    $region5: #{tpu_custom_call.1} parent=1 // pred_fallthru
      _
    // Predicated region
    $region6: #{tpu_custom_call.1} parent=1 // pred_check
      _
    $region7: #{tpu_custom_call.1} parent=1 // pred_check_branch
      %11 = sbr.rel (0) target = $region9
    $region8: #{tpu_custom_call.1} parent=1 // pred_region
      _
    $region9: #{tpu_custom_call.1} parent=1 // pred_fallthru
      _
    %v12 = vld [vmem:[%s0] sm:$0xff]
    %v13 = vld [vmem:[%s1] sm:$0xff]
    %v14 = vld [vmem:[%s1 + $0x8] sm:$0xff]
    %v15 = vld [vmem:[%s1 + $0x10] sm:$0xff]
    %v16 = vld [vmem:[%s1 + $0x18] sm:$0xff]
    %v17 = vld [vmem:[%s1 + $0x20] sm:$0xff]
    %v18 = vld [vmem:[%s1 + $0x28] sm:$0xff]
    %v19 = vld [vmem:[%s1 + $0x30] sm:$0xff]
    %v20 = vld [vmem:[%s1 + $0x38] sm:$0xff]
    %v21 = vld [vmem:[%s1 + $0x40] sm:$0xff]
    %v22 = vld [vmem:[%s1 + $0x48] sm:$0xff]
    %v23 = vld [vmem:[%s1 + $0x50] sm:$0xff]
    %v24 = vld [vmem:[%s1 + $0x58] sm:$0xff]
    %v25 = vld [vmem:[%s1 + $0x60] sm:$0xff]
    %v26 = vld [vmem:[%s1 + $0x68] sm:$0xff]
    %v27 = vld [vmem:[%s1 + $0x70] sm:$0xff]
    %v28 = vld [vmem:[%s1 + $0x78] sm:$0xff]
    %vm29 = vcmask 261120
    %v31 = vsel %vm29, %v12, 0
    %v34 = vsel %vm29, %v13, 0
    %v37 = vsel %vm29, %v14, 0
    %v40 = vsel %vm29, %v15, 0
    %v43 = vsel %vm29, %v16, 0
    %v46 = vsel %vm29, %v17, 0
    %v49 = vsel %vm29, %v18, 0
    %v52 = vsel %vm29, %v19, 0
    %v55 = vsel %vm29, %v20, 0
    %v58 = vsel %vm29, %v21, 0
    %v61 = vsel %vm29, %v22, 0
    %v64 = vsel %vm29, %v23, 0
    %v67 = vsel %vm29, %v24, 0
    %v70 = vsel %vm29, %v25, 0
    %v73 = vsel %vm29, %v26, 0
    %v76 = vsel %vm29, %v27, 0
    %v79 = vsel %vm29, %v28, 0
    %81 = vmatprep.subr.mxu0 0.0
    %82 = vmatpush1.xpose.msra.mxu0 %v79
    %83 = vmatprep.subr.mxu0 0.0
    %84 = vmatpush1.xpose.msra.mxu0 %v76
    %85 = vmatprep.subr.mxu0 0.0
    %86 = vmatpush1.xpose.msra.mxu0 %v73
    %87 = vmatprep.subr.mxu0 0.0
    %88 = vmatpush1.xpose.msra.mxu0 %v70
    %89 = vmatprep.subr.mxu0 0.0
    %90 = vmatpush1.xpose.msra.mxu0 %v67
    %91 = vmatprep.subr.mxu0 0.0
    %92 = vmatpush1.xpose.msra.mxu0 %v64
    %93 = vmatprep.subr.mxu0 0.0
    %94 = vmatpush1.xpose.msra.mxu0 %v61
    %95 = vmatprep.subr.mxu0 0.0
    %96 = vmatpush1.xpose.msra.mxu0 %v58
    %97 = vmatprep.subr.mxu0 0.0
    %98 = vmatpush1.xpose.msra.mxu0 %v55
    %99 = vmatprep.subr.mxu0 0.0
    %100 = vmatpush1.xpose.msra.mxu0 %v52
    %101 = vmatprep.subr.mxu0 0.0
    %102 = vmatpush1.xpose.msra.mxu0 %v49
    %103 = vmatprep.subr.mxu0 0.0
    %104 = vmatpush1.xpose.msra.mxu0 %v46
    %105 = vmatprep.subr.mxu0 0.0
    %106 = vmatpush1.xpose.msra.mxu0 %v43
    %107 = vmatprep.subr.mxu0 0.0
    %108 = vmatpush1.xpose.msra.mxu0 %v40
    %109 = vmatprep.subr.mxu0 0.0
    %110 = vmatpush1.xpose.msra.mxu0 %v37
    %111 = vmatprep.subr.mxu0 0.0
    %112 = vmatpush1.xpose.msra.mxu0 %v34
    %113 = vmatprep.subr.mxu0 0.0
    %114 = vmatpush2.xpose.msra.mxu0 0.0
    %115 = vmatprep.subr.mxu0 0.0
    %116 = vmatpush2.xpose.msra.mxu0 0.0
    %117 = vmatprep.subr.mxu0 0.0
    %118 = vmatpush2.xpose.msra.mxu0 0.0
    %119 = vmatprep.subr.mxu0 0.0
    %120 = vmatpush2.xpose.msra.mxu0 0.0
    %121 = vmatprep.subr.mxu0 0.0
    %122 = vmatpush2.xpose.msra.mxu0 0.0
    %123 = vmatprep.subr.mxu0 0.0
    %124 = vmatpush2.xpose.msra.mxu0 0.0
    %125 = vmatprep.subr.mxu0 0.0
    %126 = vmatpush2.xpose.msra.mxu0 0.0
    %127 = vmatprep.subr.mxu0 0.0
    %128 = vmatpush2.xpose.msra.mxu0 0.0
    %129 = vmatprep.subr.mxu0 0.0
    %130 = vmatpush2.xpose.msra.mxu0 0.0
    %131 = vmatprep.subr.mxu0 0.0
    %132 = vmatpush2.xpose.msra.mxu0 0.0
    %133 = vmatprep.subr.mxu0 0.0
    %134 = vmatpush2.xpose.msra.mxu0 0.0
    %135 = vmatprep.subr.mxu0 0.0
    %136 = vmatpush2.xpose.msra.mxu0 0.0
    %137 = vmatprep.subr.mxu0 0.0
    %138 = vmatpush2.xpose.msra.mxu0 0.0
    %139 = vmatprep.subr.mxu0 0.0
    %140 = vmatpush2.xpose.msra.mxu0 0.0
    %141 = vmatprep.subr.mxu0 0.0
    %142 = vmatpush2.xpose.msra.mxu0 0.0
    %143 = vmatprep.subr.mxu0 0.0
    %144 = vmatpush2.xpose.msra.mxu0 0.0
    %145 = vmatprep.mubr.f32.mxu0 0.0
    %146 = vmatmul.mubr.f32.gmra.mxu0 %v31
    %v147 = vpop.f32.mrf.mxu0
    %v148 = vadd.f32 0.0, %v147
    %v149 = vpop.f32.mrf.mxu0
    %150 = vdwg.mxu0
    %151 = vst [vmem:[#allocation2] sm:$0xff] %v148
    // Predicated region
    $region10: #{tpu_custom_call.1} parent=1 // pred_check
      _
    $region11: #{tpu_custom_call.1} parent=1 // pred_check_branch
      %153 = sbr.rel (0) target = $region13
    $region12: #{tpu_custom_call.1} parent=1 // pred_region
      %s155 = ssub.s32 128, 128
      %156 = vsyncadd [#allocation3], %s155
      %s158 = sshll.u32 [#allocation2], 4
      %s159 = int_to_ptr.vmem [resolvable:$true] %s158
      %161 = dma.vmem_to_hbm [thread:$0]  %s159, 128, %s2, [#allocation3]
    $region13: #{tpu_custom_call.1} parent=1 // pred_fallthru
      _
    // Predicated region
    $region14: #{tpu_custom_call.1} parent=1 // pred_check
      _
    $region15: #{tpu_custom_call.1} parent=1 // pred_check_branch
      %163 = sbr.rel (0) target = $region17
    $region16: #{tpu_custom_call.1} parent=1 // pred_region
      %164 = dma.done [#allocation3], 128
    $region17: #{tpu_custom_call.1} parent=1 // pred_fallthru
      _
    %165 = vsyncpa [#allocation3], 1

</llo_original>
